<compile_context>
chip_gen: v7x
topology: tpu7x:2x2x1
jax: 0.10.0
libtpu: 0.0.40
codegen_flags: <defaults>
</compile_context>

<pallas_src>
import math

import jax
import jax.numpy as jnp
from jax import lax
from jax.experimental import pallas as pl
from jax.experimental.pallas import tpu as pltpu


def _pick_row_tile(L):
    # Largest 8..1024 power-of-two tile that divides L; else take the full length.
    for cand in (1024, 512, 256, 128, 64, 32, 16, 8):
        if L % cand == 0:
            return cand
    return L


def _pick_lane_tile(d_pad):
    # d_pad is always a multiple of 128.
    for cand in (512, 256, 128):
        if d_pad % cand == 0:
            return cand
    return 128


def token_embedding_forward(x_ncl, weight):
    """x_ncl: (B, c_in, L), weight: (d_model, c_in, 3) -> (B, L, d_model)."""
    B, C, L = x_ncl.shape
    D = weight.shape[0]
    D_pad = ((D + 127) // 128) * 128

    # Fused tap matrix: rows [W_k0^T ; W_k1^T ; W_k2^T]  -> (3C, D_pad).
    w_cat = jnp.concatenate(
        [weight[:, :, 0].T, weight[:, :, 1].T, weight[:, :, 2].T], axis=0)
    if D_pad != D:
        w_cat = jnp.pad(w_cat, ((0, 0), (0, D_pad - D)))

    # NCL -> NLC glue (channels-last).  Input traffic is small next to the output
    # whenever d_model >> c_in, so this extra XLA pass is a minor cost.
    x_nlc = jnp.transpose(x_ncl, (0, 2, 1))  # (B, L, C)

    TL = _pick_row_tile(L)
    TD = _pick_lane_tile(D_pad)
    nL = L // TL
    nD = D_pad // TD

    def kernel(x_ref, w_ref, o_ref):
        # x_ref: (1, L, C)   full-L block of the current batch element (resident)
        # w_ref: (3C, TD)    fused-tap weight tile
        # o_ref: (1, TL, TD) lane-dense output tile
        l = pl.program_id(1)
        s = pl.multiple_of(l * TL, TL)
        x_mid = x_ref[0, pl.ds(s, TL), :]                 # (TL, C) rows [s, s+TL)
        if L == 1:
            # Circular conv with L == 1: prev == next == self.
            lhs = jnp.concatenate([x_mid, x_mid, x_mid], axis=-1)
        else:
            prev_i = jnp.where(l == 0, L - 1, s - 1)      # (s - 1)  mod L
            next_i = jnp.where(l == nL - 1, 0, s + TL)    # (s + TL) mod L
            row_p = x_ref[0, pl.ds(prev_i, 1), :]         # (1, C) halo row
            row_n = x_ref[0, pl.ds(next_i, 1), :]         # (1, C) halo row
            x_prev = jnp.concatenate([row_p, x_mid[:-1, :]], axis=0)   # (TL, C)
            x_next = jnp.concatenate([x_mid[1:, :], row_n], axis=0)    # (TL, C)
            lhs = jnp.concatenate([x_prev, x_mid, x_next], axis=-1)    # (TL, 3C)
        o_ref[0] = jnp.dot(lhs, w_ref[...],
                           preferred_element_type=jnp.float32).astype(o_ref.dtype)

    itemsize = jnp.dtype(x_ncl.dtype).itemsize
    cost = pl.CostEstimate(
        flops=2 * B * L * 3 * C * D_pad,
        transcendentals=0,
        bytes_accessed=(B * L * C + 3 * C * D_pad + B * L * D_pad) * itemsize,
    )

    out_padded = pl.pallas_call(
        kernel,
        out_shape=jax.ShapeDtypeStruct((B, L, D_pad), x_ncl.dtype),
        grid_spec=pltpu.PrefetchScalarGridSpec(
            num_scalar_prefetch=0,
            grid=(B, nL, nD),
            in_specs=[
                pl.BlockSpec((1, L, C), lambda b, l, d: (b, 0, 0)),
                pl.BlockSpec((3 * C, TD), lambda b, l, d: (0, d)),
            ],
            out_specs=pl.BlockSpec((1, TL, TD), lambda b, l, d: (b, l, d)),
        ),
        compiler_params=pltpu.CompilerParams(
            dimension_semantics=("parallel", "parallel", "parallel"),
        ),
        cost_estimate=cost,
    )(x_nlc, w_cat)

    return out_padded[..., :D] if D_pad != D else out_padded


def _reference_forward(x_ncl, weight):
    """Plain-JAX reference: circular-pad Conv1d then transpose (matches PyTorch)."""
    x_pad = jnp.pad(x_ncl, ((0, 0), (0, 0), (1, 1)), mode="wrap")  # circular pad=1
    y = lax.conv_general_dilated(
        x_pad, weight,
        window_strides=(1,), padding="VALID",
        dimension_numbers=("NCH", "OIH", "NCH"),
    )  # (B, d_model, L)
    return jnp.transpose(y, (0, 2, 1))  # (B, L, d_model)


def _kaiming_normal_fan_in_leaky_relu(key, shape):
    # PyTorch kaiming_normal_(mode='fan_in', nonlinearity='leaky_relu'):
    # fan_in = c_in * kernel_size, gain = sqrt(2 / (1 + 0.01^2))
    d_model, c_in, ksize = shape
    fan_in = c_in * ksize
    gain = math.sqrt(2.0 / (1.0 + 0.01 ** 2))
    std = gain / math.sqrt(fan_in)
    return std * jax.random.normal(key, shape, dtype=jnp.float32)


if __name__ == "__main__":
    B, C_IN, L, D_MODEL = 2, 4, 16, 32

    key = jax.random.PRNGKey(0)
    kx, kw = jax.random.split(key)

    x = jax.random.normal(kx, (B, C_IN, L), dtype=jnp.float32)       # PyTorch NCL input
    weight = _kaiming_normal_fan_in_leaky_relu(kw, (D_MODEL, C_IN, 3))

    fwd = jax.jit(token_embedding_forward)
    out = jax.block_until_ready(fwd(x, weight))

    ref = jax.block_until_ready(_reference_forward(x, weight))
    assert out.shape == (B, L, D_MODEL)
    assert jnp.allclose(out, ref, atol=1e-5, rtol=1e-5), "mismatch vs reference conv"

    print("KERNEL_OK")
</pallas_src>

<mosaic_0001>
module attributes {stable_mosaic.version = 11 : i64} {
  func.func @kernel(%arg0: i32, %arg1: i32, %arg2: i32, %arg3: memref<1x16x4xf32, #tpu.memory_space<vmem>>, %arg4: memref<12x128xf32, #tpu.memory_space<vmem>>, %arg5: memref<1x16x128xf32, #tpu.memory_space<vmem>>) attributes {dimension_semantics = [#tpu.dimension_semantics<parallel>, #tpu.dimension_semantics<parallel>, #tpu.dimension_semantics<parallel>], iteration_bounds = array<i64: 2, 1, 1>, scalar_prefetch = 0 : i64, scratch_operands = 0 : i64, tpu.core_type = #tpu.core_type<tc>, window_params = [{transform_indices = @transform_0, window_bounds = array<i64: 1, 16, 4>}, {transform_indices = @transform_1, window_bounds = array<i64: 12, 128>}, {transform_indices = @transform_2, window_bounds = array<i64: 1, 16, 128>}]} {
    %c16_i32 = arith.constant 16 : i32
    %0 = arith.muli %arg1, %c16_i32 : i32
    %1 = tpu.assume_multiple %0, 16 : i32
    %c0 = arith.constant 0 : index
    %2 = arith.index_cast %1 : i32 to index
    %c0_0 = arith.constant 0 : index
    %3 = vector.load %arg3[%c0, %2, %c0_0] : memref<1x16x4xf32, #tpu.memory_space<vmem>>, vector<1x16x4xf32>
    %4 = vector.shape_cast %3 : vector<1x16x4xf32> to vector<16x4xf32>
    %c0_i32 = arith.constant 0 : i32
    %5 = arith.cmpi eq, %arg1, %c0_i32 : i32
    %c1_i32 = arith.constant 1 : i32
    %6 = arith.subi %1, %c1_i32 : i32
    %c15_i32 = arith.constant 15 : i32
    %7 = arith.select %5, %c15_i32, %6 : i32
    %c0_i32_1 = arith.constant 0 : i32
    %8 = arith.cmpi eq, %arg1, %c0_i32_1 : i32
    %c16_i32_2 = arith.constant 16 : i32
    %9 = arith.addi %1, %c16_i32_2 : i32
    %c0_i32_3 = arith.constant 0 : i32
    %10 = arith.select %8, %c0_i32_3, %9 : i32
    %c0_4 = arith.constant 0 : index
    %11 = arith.index_cast %7 : i32 to index
    %c0_5 = arith.constant 0 : index
    %12 = vector.load %arg3[%c0_4, %11, %c0_5] : memref<1x16x4xf32, #tpu.memory_space<vmem>>, vector<1x1x4xf32>
    %13 = vector.shape_cast %12 : vector<1x1x4xf32> to vector<1x4xf32>
    %c0_6 = arith.constant 0 : index
    %14 = arith.index_cast %10 : i32 to index
    %c0_7 = arith.constant 0 : index
    %15 = vector.load %arg3[%c0_6, %14, %c0_7] : memref<1x16x4xf32, #tpu.memory_space<vmem>>, vector<1x1x4xf32>
    %16 = vector.shape_cast %15 : vector<1x1x4xf32> to vector<1x4xf32>
    %17 = vector.extract_strided_slice %4 {offsets = [0, 0], sizes = [15, 4], strides = [1, 1]} : vector<16x4xf32> to vector<15x4xf32>
    %18 = tpu.concatenate %13, %17 in 0 : vector<1x4xf32>, vector<15x4xf32> -> vector<16x4xf32>
    %19 = vector.extract_strided_slice %4 {offsets = [1, 0], sizes = [15, 4], strides = [1, 1]} : vector<16x4xf32> to vector<15x4xf32>
    %20 = tpu.concatenate %19, %16 in 0 : vector<15x4xf32>, vector<1x4xf32> -> vector<16x4xf32>
    %21 = tpu.concatenate %18, %4, %20 in 1 : vector<16x4xf32>, vector<16x4xf32>, vector<16x4xf32> -> vector<16x12xf32>
    %c0_8 = arith.constant 0 : index
    %c0_9 = arith.constant 0 : index
    %22 = vector.load %arg4[%c0_8, %c0_9] : memref<12x128xf32, #tpu.memory_space<vmem>>, vector<12x128xf32>
    %cst = arith.constant dense<0.000000e+00> : vector<16x128xf32>
    %23 = tpu.matmul %21, %22, %cst {dimension_numbers = #tpu.dot_dimension_numbers<[1], [0], [0], [1], [0, 0, 1, 1], [], []>} : vector<16x12xf32>, vector<12x128xf32>, vector<16x128xf32> -> vector<16x128xf32>
    %c0_10 = arith.constant 0 : index
    %c0_11 = arith.constant 0 : index
    %c0_12 = arith.constant 0 : index
    %24 = vector.load %arg5[%c0_10, %c0_11, %c0_12] : memref<1x16x128xf32, #tpu.memory_space<vmem>>, vector<1x16x128xf32>
    %25 = vector.shape_cast %24 : vector<1x16x128xf32> to vector<16x128xf32>
    %26 = vector.shape_cast %23 : vector<16x128xf32> to vector<1x16x128xf32>
    tpu.vector_store %arg5[%c0_10, %c0_11, %c0_12], %26 {strides = array<i32>} : memref<1x16x128xf32, #tpu.memory_space<vmem>>, vector<1x16x128xf32>,
    return
  }
  func.func @transform_0(%arg0: i32, %arg1: i32, %arg2: i32) -> (i32, i32, i32) {
    %c0_i32 = arith.constant 0 : i32
    %c0_i32_0 = arith.constant 0 : i32
    %c0_i32_1 = arith.constant 0 : i32
    return %arg0, %c0_i32, %c0_i32_0 : i32, i32, i32
  }
  func.func @transform_1(%arg0: i32, %arg1: i32, %arg2: i32) -> (i32, i32) {
    %c0_i32 = arith.constant 0 : i32
    %c0_i32_0 = arith.constant 0 : i32
    return %c0_i32, %arg2 : i32, i32
  }
  func.func @transform_2(%arg0: i32, %arg1: i32, %arg2: i32) -> (i32, i32, i32) {
    %c0_i32 = arith.constant 0 : i32
    return %arg0, %arg1, %arg2 : i32, i32, i32
  }
}

</mosaic_0001>

<llo_original>
// kernel: token_embedding_forward.1
$region0: #{token_embedding_forward.1}
  #allocation0 [shape = 'u32[]', space=smem, size = 0x4, offset = 0x4, fixed_abs, tag = 'smem constant byte address 0x4 - core index']
  #allocation1 [shape = 'u32[144,128]{1,0:T(1,128)}', space=vmem, size = 0x12000, scoped, tag = 'internal scratch']
  %s0 = inlined_call_operand.vmem [shape: f32[2,16,4], index: 0, kind: input, shape index: {}]
  %s1 = inlined_call_operand.vmem [shape: f32[12,128], index: 1, kind: input, shape index: {}]
  %s2 = inlined_call_operand.hbm [shape: f32[2,16,128], index: 2, kind: output, shape index: {}]
  %s3 = sld [smem:[#allocation0]]
  $region41: #{token_embedding_forward.1} parent=0
    _
  %s5 = ssub.s32 1, %s3
  %s6 = scalar_select 0, %s5, %s3
  $region1: #{token_embedding_forward.1} parent=0
    #allocation2 [shape = 'u8[16384]{0}', space=vmem, size = 0x4000, scoped, tag = 'output window, operand 0']
    #allocation3 [shape = 's32[2]{0}', space=sflag, size = 0x8, scoped, tag = 'scoped memory for token_embedding_forward.1']
    %7 = vsyncpa [#allocation3], 0
    %s8 = scalar_lea.sflag [#allocation3], 1
    %9 = vsyncpa %s8, 0
    loop: start=0, step=1, limit=4
    $region2: #{token_embedding_forward.1} parent=1 // loop_pre_header
      _
    $region3: #{token_embedding_forward.1} parent=1 // loop_header
      %s11 = sphi 0, %s15
      %p12 = scmp.ge.s32.totalorder %s11, 4
      %s18 = sphi 0, %s37
      %s19 = sphi 0, %s33
      %s20 = sphi 0, %s29
      %s21 = sphi 0, %s18
      %s22 = sphi 0, %s19
      %s23 = sphi 0, %s20
      %s24 = sphi 0, %s21
      %s25 = sphi 0, %s22
      %s26 = sphi 0, %s23
      %s40 = sphi 0, %s42
      %s43 = sphi 0, %s40
      %s44 = sphi 0, %s43
      %s60 = sphi 0, %s44
      %s66 = sphi 0, %s68
      %s69 = sphi 0, %s66
      %s70 = sphi 0, %s69
      %s86 = sphi 0, %s70
      %s96 = sphi 0, %s98
      %s99 = sphi 0, %s96
      %s100 = sphi 0, %s99
      %s116 = sphi 0, %s100
    $region4: #{token_embedding_forward.1} parent=1 // loop_header_branch
      %14 = sbr.rel (%p12) target = $region8
    $region5: #{token_embedding_forward.1} parent=1 // loop_body
      %s16 = ssub.s32 %s11, 1
      %s17 = ssub.s32 %s11, 2
      %s27 = sadd.s32 1, %s20
      %p28 = scmp.ge.s32.totalorder %s27, 1
      %s29 = scalar_select %p28, 0, %s27
      %s30 = sadd.s32 1, %s19
      %s31 = scalar_select %p28, %s30, %s19
      %p32 = scmp.ge.s32.totalorder %s31, 1
      %s33 = scalar_select %p32, 0, %s31
      %s34 = sadd.s32 1, %s18
      %s35 = scalar_select %p32, %s34, %s18
      %p36 = scmp.ge.s32.totalorder %s35, 2
      %s37 = scalar_select %p36, 0, %s35
      %s38 = ssub.s32 %s18, %s37
      %p39 = scmp.eq.s32.totalorder %s38, 0
      %s41 = sadd.s32 %s40, 1
      %s42 = scalar_select %p39, %s40, %s41
      %p45 = pneg %p39
      %p46 = scmp.eq.s32.totalorder %s11, 1
      %p47 = por %p45, %p46
      %p48 = scmp.ne.s32.totalorder %s40, %s43
      %p49 = scmp.eq.s32.totalorder %s11, 0
      %p50 = por %p48, %p49
      %p51 = scmp.ne.s32.totalorder %s40, %s43
      %p52 = scmp.eq.s32.totalorder %s16, 1
      %p53 = por %p51, %p52
      %p54 = scmp.ne.s32.totalorder %s43, %s44
      %p55 = scmp.eq.s32.totalorder %s16, 0
      %p56 = por %p54, %p55
      %p57 = scmp.ne.s32.totalorder %s43, %s44
      %p58 = scmp.eq.s32.totalorder %s17, 1
      %p59 = por %p57, %p58
      %p61 = scmp.ne.s32.totalorder %s44, %s60
      %p62 = scmp.eq.s32.totalorder %s17, 0
      %p63 = por %p61, %p62
      %s64 = ssub.s32 %s20, %s29
      %p65 = scmp.eq.s32.totalorder %s64, 0
      %s67 = sadd.s32 %s66, 1
      %s68 = scalar_select %p65, %s66, %s67
      %p71 = pneg %p65
      %p72 = scmp.eq.s32.totalorder %s11, 1
      %p73 = por %p71, %p72
      %p74 = scmp.ne.s32.totalorder %s66, %s69
      %p75 = scmp.eq.s32.totalorder %s11, 0
      %p76 = por %p74, %p75
      %p77 = scmp.ne.s32.totalorder %s66, %s69
      %p78 = scmp.eq.s32.totalorder %s16, 1
      %p79 = por %p77, %p78
      %p80 = scmp.ne.s32.totalorder %s69, %s70
      %p81 = scmp.eq.s32.totalorder %s16, 0
      %p82 = por %p80, %p81
      %p83 = scmp.ne.s32.totalorder %s69, %s70
      %p84 = scmp.eq.s32.totalorder %s17, 1
      %p85 = por %p83, %p84
      %p87 = scmp.ne.s32.totalorder %s70, %s86
      %p88 = scmp.eq.s32.totalorder %s17, 0
      %p89 = por %p87, %p88
      %s90 = ssub.s32 %s18, %s37
      %s91 = ssub.s32 %s19, %s33
      %s92 = sor.u32 %s90, %s91
      %s93 = ssub.s32 %s20, %s29
      %s94 = sor.u32 %s92, %s93
      %p95 = scmp.eq.s32.totalorder %s94, 0
      %s97 = sadd.s32 %s96, 1
      %s98 = scalar_select %p95, %s96, %s97
      %p101 = pneg %p95
      %p102 = scmp.eq.s32.totalorder %s11, 1
      %p103 = por %p101, %p102
      %p104 = scmp.ne.s32.totalorder %s96, %s99
      %p105 = scmp.eq.s32.totalorder %s11, 0
      %p106 = por %p104, %p105
      %p107 = scmp.ne.s32.totalorder %s96, %s99
      %p108 = scmp.eq.s32.totalorder %s16, 1
      %p109 = por %p107, %p108
      %p110 = scmp.ne.s32.totalorder %s99, %s100
      %p111 = scmp.eq.s32.totalorder %s16, 0
      %p112 = por %p110, %p111
      %p113 = scmp.ne.s32.totalorder %s99, %s100
      %p114 = scmp.eq.s32.totalorder %s17, 1
      %p115 = por %p113, %p114
      %p117 = scmp.ne.s32.totalorder %s100, %s116
      %p118 = scmp.eq.s32.totalorder %s17, 0
      %p119 = por %p117, %p118
      %p120 = scmp.le.s32.totalorder 1, %s11
      %p121 = scmp.lt.s32.totalorder %s11, 3
      %p122 = pnand %p120, %p121
      %p123 = pneg %p122
      // Predicated region
      $region9: #{token_embedding_forward.1} parent=5 // pred_check
        _
      $region10: #{token_embedding_forward.1} parent=5 // pred_check_branch
        %125 = sbr.rel (%p122) target = $region12
      $region11: #{token_embedding_forward.1} parent=5 // pred_region
        %s126 = ssub.s32 %s11, 1
        // Predicated region
        $region13: #{token_embedding_forward.1} parent=11 // pred_check
          %p127 = pneg %p82
        $region14: #{token_embedding_forward.1} parent=11 // pred_check_branch
          %129 = sbr.rel (%p127) target = $region16
        $region15: #{token_embedding_forward.1} parent=11 // pred_region
          %p130 = scmp.lt.s32.totalorder %s23, 0
          %s131 = scalar_select %p130, %s23, 0
          %s132 = smul.addr %s131, 8
          %s133 = scalar_lea.vmem %s1, %s132
        $region16: #{token_embedding_forward.1} parent=11 // pred_fallthru
          _
      $region12: #{token_embedding_forward.1} parent=5 // pred_fallthru
        _
      %p134 = scmp.lt.s32.totalorder %s11, 2
      // Predicated region
      $region17: #{token_embedding_forward.1} parent=5 // pred_check
        %p135 = pneg %p134
      $region18: #{token_embedding_forward.1} parent=5 // pred_check_branch
        %137 = sbr.rel (%p135) target = $region20
      $region19: #{token_embedding_forward.1} parent=5 // pred_region
        // Predicated region
        $region21: #{token_embedding_forward.1} parent=19 // pred_check
          %p138 = pneg %p50
        $region22: #{token_embedding_forward.1} parent=19 // pred_check_branch
          %140 = sbr.rel (%p138) target = $region24
        $region23: #{token_embedding_forward.1} parent=19 // pred_region
          %p141 = scmp.lt.s32.totalorder %s18, 1
          %s142 = scalar_select %p141, %s18, 1
          %s143 = smul.addr %s142, 2
          %s144 = smul.addr %s143, 8
          %s145 = scalar_lea.vmem %s0, %s144
        $region24: #{token_embedding_forward.1} parent=19 // pred_fallthru
          _
      $region20: #{token_embedding_forward.1} parent=5 // pred_fallthru
        _
      %p146 = scmp.le.s32.totalorder 1, %s11
      %p147 = scmp.lt.s32.totalorder %s11, 3
      %p148 = pnand %p146, %p147
      %p149 = pneg %p148
      // Predicated region
      $region25: #{token_embedding_forward.1} parent=5 // pred_check
        _
      $region26: #{token_embedding_forward.1} parent=5 // pred_check_branch
        %151 = sbr.rel (%p148) target = $region28
      $region27: #{token_embedding_forward.1} parent=5 // pred_region
        %s152 = ssub.s32 %s11, 1
        %p153 = scmp.lt.s32.totalorder %s21, 1
        %s154 = scalar_select %p153, %s21, 1
        %s155 = smul.addr %s154, 2
        %s156 = smul.addr %s155, 8
        %s157 = scalar_lea.vmem %s0, %s156
        %p158 = pneg %p56
        %p159 = pneg %p53
        %p160 = scmp.lt.s32.totalorder %s23, 0
        %s161 = scalar_select %p160, %s23, 0
        %s162 = smul.addr %s161, 8
        %s163 = scalar_lea.vmem %s1, %s162
        %p164 = pneg %p82
        %p165 = pneg %p79
        %p166 = pneg %p112
        %p167 = pneg %p109
        %s168 = sand.u32 %s99, 1
        %s169 = scalar_lea.sflag [#allocation3], %s168
        %s170 = sand.u32 %s99, 1
        %s171 = smul.addr %s170, 16
        %s172 = scalar_lea.vmem [#allocation2], %s171
        %p173 = scmp.lt.s32.totalorder %s21, 1
        %s174 = scalar_select %p173, %s21, 1
        %s175 = smul.addr %s174, 2
        %s176 = smul.addr %s175, 8
        %s177 = scalar_lea.vmem %s0, %s176
        %p178 = scmp.lt.s32.totalorder %s23, 0
        %s179 = scalar_select %p178, %s23, 0
        %s180 = smul.addr %s179, 8
        %s181 = scalar_lea.vmem %s1, %s180
        %s182 = smul.u32 2, %s22
        %s183 = smul.u32 %s22, 16
        %s184 = scalar_lea.vmem %s177, %s183
        %v185 = vld [vmem:[%s184] sm:$0xff]
        %v186 = vld [vmem:[%s184 + $0x8] sm:$0xff]
        %p187 = scmp.eq.s32.totalorder %s22, 0
        %s188 = ssub.s32 %s183, 1
        %s189 = scalar_select %p187, 15, %s188
        %s190 = sadd.s32 %s183, 16
        %s191 = scalar_select %p187, 0, %s190
        %s192 = scalar_lea.vmem %s177, %s189
        %v193 = vld [vmem:[%s192] sm:$0x1]
        %s194 = scalar_lea.vmem %s177, %s191
        %v195 = vld [vmem:[%s194] sm:$0x1]
        %vm198 = vcmask 1040384
        %v199 = vrot.slane %v185, 7
        %v200 = vrot.slane %v186, 7
        %v201 = vsel %vm198, %v199, %v200
        %v204 = vsel %vm198, %v193, %v199
        %vm205 = vcmask 1046528
        %v206 = vrot.slane %v185, 1
        %v207 = vrot.slane %v186, 1
        %v208 = vsel %vm205, %v206, %v207
        %v211 = vrot.slane %v195, 1
        %v213 = vsel %vm205, %v207, %v211
        %214 = vrot.lane.b32.xlu0 %v185, 4
        %v215 = vpop.permute.xlu0 %214
        %216 = vrot.lane.b32.xlu0 %v186, 4
        %v217 = vpop.permute.xlu0 %216
        %221 = vrot.lane.b32.xlu0 %v208, 8
        %v222 = vpop.permute.xlu0 %221
        %223 = vrot.lane.b32.xlu0 %v213, 8
        %v224 = vpop.permute.xlu0 %223
        %vm227 = vcmask 31744
        %v228 = vsel %vm227, %v204, %v215
        %v229 = vsel %vm227, %v201, %v217
        %vm230 = vcmask 64512
        %v231 = vsel %vm230, %v228, %v222
        %v232 = vsel %vm230, %v229, %v224
        %v233 = vld [vmem:[%s181] sm:$0xff]
        %v234 = vld [vmem:[%s181 + $0x8] sm:$0xf]
        %vm235 = vcmask 97280
        %v237 = vsel %vm235, %v231, 0
        %v240 = vsel %vm235, %v232, 0
        %vm242 = vcmask 1043456
        %v244 = vsel %vm242, %v234, 0
        %246 = vmatprep.subr.mxu0 0.0
        %247 = vmatpush1.msra.mxu0 %v233
        %248 = vmatprep.subr.mxu0 0.0
        %249 = vmatpush1.msra.mxu0 %v244
        %250 = vmatprep.subr.mxu0 0.0
        %251 = vmatpush1.msra.mxu0 0.0
        %252 = vmatprep.subr.mxu0 0.0
        %253 = vmatpush1.msra.mxu0 0.0
        %254 = vmatprep.subr.mxu0 0.0
        %255 = vmatpush1.msra.mxu0 0.0
        %256 = vmatprep.subr.mxu0 0.0
        %257 = vmatpush1.msra.mxu0 0.0
        %258 = vmatprep.subr.mxu0 0.0
        %259 = vmatpush1.msra.mxu0 0.0
        %260 = vmatprep.subr.mxu0 0.0
        %261 = vmatpush1.msra.mxu0 0.0
        %262 = vmatprep.subr.mxu0 0.0
        %263 = vmatpush1.msra.mxu0 0.0
        %264 = vmatprep.subr.mxu0 0.0
        %265 = vmatpush1.msra.mxu0 0.0
        %266 = vmatprep.subr.mxu0 0.0
        %267 = vmatpush1.msra.mxu0 0.0
        %268 = vmatprep.subr.mxu0 0.0
        %269 = vmatpush1.msra.mxu0 0.0
        %270 = vmatprep.subr.mxu0 0.0
        %271 = vmatpush1.msra.mxu0 0.0
        %272 = vmatprep.subr.mxu0 0.0
        %273 = vmatpush1.msra.mxu0 0.0
        %274 = vmatprep.subr.mxu0 0.0
        %275 = vmatpush1.msra.mxu0 0.0
        %276 = vmatprep.subr.mxu0 0.0
        %277 = vmatpush1.msra.mxu0 0.0
        %278 = vmatprep.subr.mxu0 0.0
        %279 = vmatpush1.msra.mxu0 0.0
        %280 = vmatprep.subr.mxu0 0.0
        %281 = vmatpush1.msra.mxu0 0.0
        %282 = vmatprep.subr.mxu0 0.0
        %283 = vmatpush1.msra.mxu0 0.0
        %284 = vmatprep.subr.mxu0 0.0
        %285 = vmatpush1.msra.mxu0 0.0
        %286 = vmatprep.subr.mxu0 0.0
        %287 = vmatpush1.msra.mxu0 0.0
        %288 = vmatprep.subr.mxu0 0.0
        %289 = vmatpush1.msra.mxu0 0.0
        %290 = vmatprep.subr.mxu0 0.0
        %291 = vmatpush1.msra.mxu0 0.0
        %292 = vmatprep.subr.mxu0 0.0
        %293 = vmatpush1.msra.mxu0 0.0
        %294 = vmatprep.subr.mxu0 0.0
        %295 = vmatpush1.msra.mxu0 0.0
        %296 = vmatprep.subr.mxu0 0.0
        %297 = vmatpush1.msra.mxu0 0.0
        %298 = vmatprep.subr.mxu0 0.0
        %299 = vmatpush1.msra.mxu0 0.0
        %300 = vmatprep.subr.mxu0 0.0
        %301 = vmatpush1.msra.mxu0 0.0
        %302 = vmatprep.subr.mxu0 0.0
        %303 = vmatpush1.msra.mxu0 0.0
        %304 = vmatprep.subr.mxu0 0.0
        %305 = vmatpush1.msra.mxu0 0.0
        %306 = vmatprep.subr.mxu0 0.0
        %307 = vmatpush1.msra.mxu0 0.0
        %308 = vmatprep.subr.mxu0 0.0
        %309 = vmatpush1.msra.mxu0 0.0
        %310 = vmatprep.mubr.f32.mxu0 0.0
        %311 = vmatmul.mubr.f32.gmra.mrb[0].mxu0 %v237
        %v312 = vpop.f32.mrb[0].mxu0
        %v313 = vadd.f32 0.0, %v312
        %v314 = vpop.f32.mrb[0].mxu0
        %315 = vmatprep.mubr.f32.mxu0 0.0
        %316 = vmatmul.mubr.f32.gmra.mrb[0].mxu0 %v240
        %v317 = vpop.f32.mrb[0].mxu0
        %v318 = vadd.f32 0.0, %v317
        %v319 = vpop.f32.mrb[0].mxu0
        %320 = vdwg.mxu0
        %321 = vst [vmem:[%s172] sm:$0xff] %v313
        %322 = vst [vmem:[%s172 + $0x8] sm:$0xff] %v318
        %s323 = sand.u32 %s99, 1
        %s324 = scalar_lea.sflag [#allocation3], %s323
        %s325 = sand.u32 %s99, 1
        %s326 = smul.addr %s325, 16
        %s327 = scalar_lea.vmem [#allocation2], %s326
        // Predicated region
        $region29: #{token_embedding_forward.1} parent=27 // pred_check
          %p328 = pneg %p109
        $region30: #{token_embedding_forward.1} parent=27 // pred_check_branch
          %330 = sbr.rel (%p328) target = $region32
        $region31: #{token_embedding_forward.1} parent=27 // pred_region
          %s331 = smul.u32 2, %s22
          %s333 = ssub.s32 256, 256
          %334 = vsyncadd %s324, %s333
          %s335 = sadd.s32 %s23, %s331
          %s336 = smul.addr %s21, 2
          %s337 = sadd.s32 %s335, %s336
          %s338 = smul.addr %s337, 128
          %s339 = scalar_lea.hbm %s2, %s338
          %s340 = sshll.u32 %s327, 4
          %s341 = int_to_ptr.vmem [resolvable:$true] %s340
          %346 = dma.vmem_to_hbm [thread:$0]  %s341, 256, %s339, %s324, 128, 128, 8
        $region32: #{token_embedding_forward.1} parent=27 // pred_fallthru
          _
      $region28: #{token_embedding_forward.1} parent=5 // pred_fallthru
        _
      %p347 = scmp.le.s32.totalorder 2, %s11
      // Predicated region
      $region33: #{token_embedding_forward.1} parent=5 // pred_check
        %p348 = pneg %p347
      $region34: #{token_embedding_forward.1} parent=5 // pred_check_branch
        %350 = sbr.rel (%p348) target = $region36
      $region35: #{token_embedding_forward.1} parent=5 // pred_region
        %s351 = ssub.s32 %s11, 2
        // Predicated region
        $region37: #{token_embedding_forward.1} parent=35 // pred_check
          %p352 = pneg %p115
        $region38: #{token_embedding_forward.1} parent=35 // pred_check_branch
          %354 = sbr.rel (%p352) target = $region40
        $region39: #{token_embedding_forward.1} parent=35 // pred_region
          %s355 = sand.u32 %s100, 1
          %s356 = scalar_lea.sflag [#allocation3], %s355
          %s357 = sand.u32 %s100, 1
          %s358 = smul.addr %s357, 16
          %s359 = scalar_lea.vmem [#allocation2], %s358
          %360 = dma.done %s356, 256
        $region40: #{token_embedding_forward.1} parent=35 // pred_fallthru
          _
      $region36: #{token_embedding_forward.1} parent=5 // pred_fallthru
        _
    $region6: #{token_embedding_forward.1} parent=1 // loop_footer
      %s15 = sadd.s32 1, %s11
    $region7: #{token_embedding_forward.1} parent=1 // loop_footer_branch
      %10 = sbr.rel target = $region3
    $region8: #{token_embedding_forward.1} parent=1 // loop_exit
      _
    %361 = vsyncpa [#allocation3], 1
    %s362 = scalar_lea.sflag [#allocation3], 1
    %363 = vsyncpa %s362, 1

</llo_original>
